<compile_context>
chip_gen: v7x
topology: tpu7x:2x2x1
jax: 0.10.0
libtpu: 0.0.40
codegen_flags: <defaults>
</compile_context>

<pallas_src>
import jax
import jax.numpy as jnp
from jax.experimental import pallas as pl
from jax.experimental.pallas import tpu as pltpu


def _round_up(x: int, m: int) -> int:
    return (x + m - 1) // m * m


def _maybe_pad2(a, rows: int, cols: int):
    """Zero-pad a 2-D array up to (rows, cols); pass-through (no copy) if already that shape."""
    pr, pc = rows - a.shape[0], cols - a.shape[1]
    if pr == 0 and pc == 0:
        return a
    return jnp.pad(a, ((0, pr), (0, pc)))


def _resident_kernel(x_ref, w_ref, s_ref, o_ref):
    # x_ref: [tm, F]      w_ref: [F, Cp] (VMEM-resident, constant block index)
    # s_ref: [1, Cp] f32  o_ref: [tm, Cp] f32
    acc = jnp.dot(x_ref[...], w_ref[...], preferred_element_type=jnp.float32)
    o_ref[...] = (acc * s_ref[...]).astype(o_ref.dtype)


def _tiled_kernel(x_ref, w_ref, s_ref, o_ref):
    # x_ref: [tm, tk]   w_ref: [tk, tn]   s_ref: [1, tn] f32
    # o_ref: [tm, tn] f32 -- constant block index across K, so it stays VMEM-resident and
    # doubles as the accumulator (no scratch).
    k = pl.program_id(2)

    @pl.when(k == 0)
    def _init():
        o_ref[...] = jnp.zeros_like(o_ref)

    o_ref[...] += jnp.dot(x_ref[...], w_ref[...], preferred_element_type=jnp.float32)

    @pl.when(k == pl.num_programs(2) - 1)
    def _finalize():
        o_ref[...] = o_ref[...] * s_ref[...]


def cosine_classifier(
    x,
    weight_v,
    weight_g,
    scale_factor=2.0,
    *,
    operand_dtype=jnp.bfloat16,
    tile_m=512,
    tile_n=512,
    tile_k=1024,
    resident_vmem_budget=36 * 1024 * 1024,   # conservative for v7x's 64 MiB VMEM
    vmem_limit_bytes=48 * 1024 * 1024,
    force_tiled=False,
):
    """scores = scale_factor * x @ (g * v / ||v||_row).T   ->   [B, C] float32."""
    B, F = x.shape
    C, Fw = weight_v.shape
    assert F == Fw, (F, Fw)

    # --- WeightNorm scale hoisted to the wrapper (always f32, independent of operand dtype).
    # NOTE: like torch's weight_norm there is no epsilon; an all-zero weight row yields inf/NaN.
    v32 = weight_v.astype(jnp.float32)
    g = jnp.reshape(weight_g, (C,)).astype(jnp.float32)
    scale_row = (scale_factor * g * jax.lax.rsqrt(jnp.sum(v32 * v32, axis=1))).reshape(1, C)

    x_op = x.astype(operand_dtype)
    wt_op = weight_v.astype(operand_dtype).T          # [F, C]: canonical MXU feed, transposed once
    op_bytes = jnp.dtype(operand_dtype).itemsize

    # --- batch tile: multiple of 8 sublanes; keep >=2 parallel tiles when B allows (v7x megacore).
    bp8 = _round_up(B, 8)
    tm = min(tile_m, bp8)
    if bp8 >= 16 and bp8 // tm < 2:
        tm = _round_up((bp8 + 1) // 2, 8)
    Bp = _round_up(B, tm)

    Cp_lane = _round_up(C, 128)                       # lane-dense output columns

    # --- weight-resident working-set estimate (weight counted twice: conservative buffering).
    resident_bytes = (
        2 * F * Cp_lane * op_bytes        # resident transposed weight
        + 2 * tm * F * op_bytes           # double-buffered x tiles
        + 2 * tm * Cp_lane * 4            # double-buffered f32 output tiles
        + 2 * Cp_lane * 4                 # scale row
    )
    use_resident = (not force_tiled) and resident_bytes <= resident_vmem_budget

    if use_resident:
        # Single pass over x; weight fetched once (constant block index). F left unpadded
        # (full-dim blocks are legal), so no extra HBM copy of x unless B needs row padding.
        x_p = _maybe_pad2(x_op, Bp, F)
        w_p = _maybe_pad2(wt_op, F, Cp_lane)
        s_p = _maybe_pad2(scale_row, 1, Cp_lane)      # padded classes -> scale 0 -> finite zeros
        out = pl.pallas_call(
            _resident_kernel,
            out_shape=jax.ShapeDtypeStruct((Bp, Cp_lane), jnp.float32),
            grid_spec=pltpu.PrefetchScalarGridSpec(
                num_scalar_prefetch=0,
                grid=(Bp // tm,),
                in_specs=[
                    pl.BlockSpec((tm, F), lambda i: (i, 0)),        # x: streamed over B
                    pl.BlockSpec((F, Cp_lane), lambda i: (0, 0)),   # W^T: constant -> fetched once
                    pl.BlockSpec((1, Cp_lane), lambda i: (0, 0)),   # scale row
                ],
                out_specs=pl.BlockSpec((tm, Cp_lane), lambda i: (i, 0)),
            ),
            compiler_params=pltpu.CompilerParams(
                dimension_semantics=("parallel",),
                vmem_limit_bytes=vmem_limit_bytes,
            ),
        )(x_p, w_p, s_p)
        return out[:B, :C]

    # --- tiled fallback: (B, C, K) grid, K innermost; accumulate into the K-resident f32 output.
    tn = min(tile_n, Cp_lane)
    Cp = _round_up(C, tn)
    if F <= tile_k:
        tk, Fp = F, F                                  # full-dim K block -> no feature padding
    else:
        tk, Fp = tile_k, _round_up(F, tile_k)

    x_p = _maybe_pad2(x_op, Bp, Fp)
    w_p = _maybe_pad2(wt_op, Fp, Cp)
    s_p = _maybe_pad2(scale_row, 1, Cp)

    out = pl.pallas_call(
        _tiled_kernel,
        out_shape=jax.ShapeDtypeStruct((Bp, Cp), jnp.float32),
        grid_spec=pltpu.PrefetchScalarGridSpec(
            num_scalar_prefetch=0,
            grid=(Bp // tm, Cp // tn, Fp // tk),
            in_specs=[
                pl.BlockSpec((tm, tk), lambda i, j, k: (i, k)),     # x
                pl.BlockSpec((tk, tn), lambda i, j, k: (k, j)),     # W^T tile (no in-kernel transpose)
                pl.BlockSpec((1, tn), lambda i, j, k: (0, j)),      # scale row
            ],
            out_specs=pl.BlockSpec((tm, tn), lambda i, j, k: (i, j)),
        ),
        compiler_params=pltpu.CompilerParams(
            dimension_semantics=("parallel", "parallel", "arbitrary"),
            vmem_limit_bytes=vmem_limit_bytes,
        ),
    )(x_p, w_p, s_p)
    return out[:B, :C]


if __name__ == "__main__":
    feature_dim = 32
    num_class = 16
    batch = 8

    key = jax.random.PRNGKey(0)
    kx, kv = jax.random.split(key)

    x = jax.random.normal(kx, (batch, feature_dim), dtype=jnp.float32)

    # Parameter init mimicking nn.Linear + WeightNorm.apply:
    #   weight_v <- initial linear weight, weight_g <- per-row norm of weight_v
    bound = 1.0 / (feature_dim ** 0.5)
    weight_v = jax.random.uniform(
        kv, (num_class, feature_dim), dtype=jnp.float32, minval=-bound, maxval=bound
    )
    weight_g = jnp.linalg.norm(weight_v, axis=1, keepdims=True)   # [C, 1]

    # Pure-JAX f32 reference of the weight-norm forward.
    w_ref = weight_g * weight_v / jnp.linalg.norm(weight_v, axis=1, keepdims=True)
    ref = 2.0 * (x @ w_ref.T)

    # 1) default: bf16 operands, weight-resident single-pass layout.
    out_resident = jax.block_until_ready(cosine_classifier(x, weight_v, weight_g))
    # 2) tiled (B, C, K) fallback path, bf16 operands.
    out_tiled = jax.block_until_ready(
        cosine_classifier(x, weight_v, weight_g, force_tiled=True))
    # 3) f32-operand path (exercises the non-default dtype configuration).
    out_f32 = jax.block_until_ready(
        cosine_classifier(x, weight_v, weight_g, operand_dtype=jnp.float32))

    assert out_resident.shape == (batch, num_class)
    assert out_tiled.shape == (batch, num_class)
    assert out_f32.shape == (batch, num_class)

    # bf16 operands -> looser tolerance against the f32 reference.
    for name, out in (("resident", out_resident), ("tiled", out_tiled), ("f32", out_f32)):
        err = float(jnp.max(jnp.abs(out - ref)))
        assert jnp.allclose(out, ref, atol=2e-2, rtol=2e-2), (name, err)
    # Both bf16 paths perform identical arithmetic -> must agree tightly.
    assert jnp.allclose(out_resident, out_tiled, atol=1e-5, rtol=1e-5), float(
        jnp.max(jnp.abs(out_resident - out_tiled)))

    print("KERNEL_OK")
</pallas_src>

<mosaic_0001>
module attributes {stable_mosaic.version = 11 : i64} {
  func.func @_resident_kernel(%arg0: i32, %arg1: memref<8x32xbf16, #tpu.memory_space<vmem>>, %arg2: memref<32x128xbf16, #tpu.memory_space<vmem>>, %arg3: memref<1x128xf32, #tpu.memory_space<vmem>>, %arg4: memref<8x128xf32, #tpu.memory_space<vmem>>) attributes {dimension_semantics = [#tpu.dimension_semantics<parallel>], iteration_bounds = array<i64: 1>, scalar_prefetch = 0 : i64, scratch_operands = 0 : i64, tpu.core_type = #tpu.core_type<tc>, window_params = [{transform_indices = @transform_0, window_bounds = array<i64: 8, 32>}, {pipeline_mode = #tpu.pipeline_mode<synchronous>, transform_indices = @transform_1, window_bounds = array<i64: 32, 128>}, {pipeline_mode = #tpu.pipeline_mode<synchronous>, transform_indices = @transform_2, window_bounds = array<i64: 1, 128>}, {transform_indices = @transform_3, window_bounds = array<i64: 8, 128>}]} {
    %c0 = arith.constant 0 : index
    %c0_0 = arith.constant 0 : index
    %0 = vector.load %arg1[%c0, %c0_0] : memref<8x32xbf16, #tpu.memory_space<vmem>>, vector<8x32xbf16>
    %c0_1 = arith.constant 0 : index
    %c0_2 = arith.constant 0 : index
    %1 = vector.load %arg2[%c0_1, %c0_2] : memref<32x128xbf16, #tpu.memory_space<vmem>>, vector<32x128xbf16>
    %cst = arith.constant dense<0.000000e+00> : vector<8x128xf32>
    %2 = tpu.matmul %0, %1, %cst {dimension_numbers = #tpu.dot_dimension_numbers<[1], [0], [0], [1], [0, 0, 1, 1], [], []>} : vector<8x32xbf16>, vector<32x128xbf16>, vector<8x128xf32> -> vector<8x128xf32>
    %c0_3 = arith.constant 0 : index
    %c0_4 = arith.constant 0 : index
    %3 = vector.load %arg3[%c0_3, %c0_4] : memref<1x128xf32, #tpu.memory_space<vmem>>, vector<1x128xf32>
    %4 = vector.broadcast %3 : vector<1x128xf32> to vector<8x128xf32>
    %5 = arith.mulf %2, %4 : vector<8x128xf32>
    %c0_5 = arith.constant 0 : index
    %c0_6 = arith.constant 0 : index
    %6 = vector.load %arg4[%c0_5, %c0_6] : memref<8x128xf32, #tpu.memory_space<vmem>>, vector<8x128xf32>
    tpu.vector_store %arg4[%c0_5, %c0_6], %5 {strides = array<i32>} : memref<8x128xf32, #tpu.memory_space<vmem>>, vector<8x128xf32>,
    return
  }
  func.func @transform_0(%arg0: i32) -> (i32, i32) {
    %c0_i32 = arith.constant 0 : i32
    %c0_i32_0 = arith.constant 0 : i32
    return %arg0, %c0_i32 : i32, i32
  }
  func.func @transform_1(%arg0: i32) -> (i32, i32) {
    %c0_i32 = arith.constant 0 : i32
    %c0_i32_0 = arith.constant 0 : i32
    %c0_i32_1 = arith.constant 0 : i32
    return %c0_i32, %c0_i32_0 : i32, i32
  }
  func.func @transform_2(%arg0: i32) -> (i32, i32) {
    %c0_i32 = arith.constant 0 : i32
    %c0_i32_0 = arith.constant 0 : i32
    %c0_i32_1 = arith.constant 0 : i32
    return %c0_i32, %c0_i32_0 : i32, i32
  }
  func.func @transform_3(%arg0: i32) -> (i32, i32) {
    %c0_i32 = arith.constant 0 : i32
    %c0_i32_0 = arith.constant 0 : i32
    return %arg0, %c0_i32 : i32, i32
  }
}

</mosaic_0001>

<llo_original>
// kernel: tpu_custom_call.1
$region0: #{tpu_custom_call.1}
  #allocation0 [shape = 'u32[]', space=smem, size = 0x4, offset = 0x4, fixed_abs, tag = 'smem constant byte address 0x4 - core index']
  #allocation1 [shape = 'u32[144,128]{1,0:T(1,128)}', space=vmem, size = 0x12000, scoped, tag = 'internal scratch']
  %s0 = inlined_call_operand.hbm [shape: bf16[8,32], index: 0, kind: input, shape index: {}]
  %s1 = inlined_call_operand.hbm [shape: bf16[32,128], index: 1, kind: input, shape index: {}]
  %s2 = inlined_call_operand.vmem [shape: f32[1,128], index: 2, kind: input, shape index: {}]
  %s3 = inlined_call_operand.hbm [shape: f32[8,128], index: 3, kind: output, shape index: {}]
  %s4 = sld [smem:[#allocation0]]
  $region30: #{tpu_custom_call.1} parent=0
    _
  %s6 = ssub.s32 1, %s4
  %s7 = scalar_select 0, %s6, %s4
  $region1: #{tpu_custom_call.1} parent=0
    #allocation2 [shape = 'u8[2048]{0}', space=vmem, size = 0x800, scoped, tag = 'input window, operand 0, single buffered']
    #allocation3 [shape = 's32[1]{0}', space=sflag, size = 0x4, scoped, tag = 'scoped memory for tpu_custom_call.1']
    #allocation4 [shape = 's32[1]{0}', space=sflag, size = 0x4, scoped, tag = 'scoped memory for tpu_custom_call.1']
    #allocation5 [shape = 'u8[8192]{0}', space=vmem, size = 0x2000, scoped, tag = 'input window, operand 1, single buffered']
    #allocation6 [shape = 's32[1]{0}', space=sflag, size = 0x4, scoped, tag = 'scoped memory for tpu_custom_call.1']
    #allocation7 [shape = 'u8[4096]{0}', space=vmem, size = 0x1000, scoped, tag = 'output window, operand 0, single buffered']
    %8 = vsyncpa [#allocation3], 0
    %9 = vsyncpa [#allocation6], 0
    %10 = vsyncpa [#allocation4], 0
    // Predicated region
    $region2: #{tpu_custom_call.1} parent=1 // pred_check
      _
    $region3: #{tpu_custom_call.1} parent=1 // pred_check_branch
      %12 = sbr.rel (0) target = $region5
    $region4: #{tpu_custom_call.1} parent=1 // pred_region
      %s14 = ssub.s32 64, 64
      %15 = vsyncadd [#allocation3], %s14
      %s17 = sshll.u32 [#allocation2], 4
      %s18 = int_to_ptr.vmem [resolvable:$true] %s17
      %20 = dma.hbm_to_vmem [thread:$0]  %s0, 64, %s18, [#allocation3]
    $region5: #{tpu_custom_call.1} parent=1 // pred_fallthru
      _
    // Predicated region
    $region6: #{tpu_custom_call.1} parent=1 // pred_check
      _
    $region7: #{tpu_custom_call.1} parent=1 // pred_check_branch
      %22 = sbr.rel (0) target = $region9
    $region8: #{tpu_custom_call.1} parent=1 // pred_region
      %s24 = ssub.s32 256, 256
      %25 = vsyncadd [#allocation6], %s24
      %s26 = sshll.u32 [#allocation5], 4
      %s27 = int_to_ptr.vmem [resolvable:$true] %s26
      %32 = dma.hbm_to_vmem [thread:$0]  %s1, 256, %s27, [#allocation6], 64, 64, 4
    $region9: #{tpu_custom_call.1} parent=1 // pred_fallthru
      _
    // Predicated region
    $region10: #{tpu_custom_call.1} parent=1 // pred_check
      _
    $region11: #{tpu_custom_call.1} parent=1 // pred_check_branch
      %34 = sbr.rel (0) target = $region13
    $region12: #{tpu_custom_call.1} parent=1 // pred_region
      _
    $region13: #{tpu_custom_call.1} parent=1 // pred_fallthru
      _
    // Predicated region
    $region14: #{tpu_custom_call.1} parent=1 // pred_check
      _
    $region15: #{tpu_custom_call.1} parent=1 // pred_check_branch
      %36 = sbr.rel (0) target = $region17
    $region16: #{tpu_custom_call.1} parent=1 // pred_region
      %37 = dma.done [#allocation3], 64
    $region17: #{tpu_custom_call.1} parent=1 // pred_fallthru
      _
    // Predicated region
    $region18: #{tpu_custom_call.1} parent=1 // pred_check
      _
    $region19: #{tpu_custom_call.1} parent=1 // pred_check_branch
      %39 = sbr.rel (0) target = $region21
    $region20: #{tpu_custom_call.1} parent=1 // pred_region
      %40 = dma.done [#allocation6], 256
    $region21: #{tpu_custom_call.1} parent=1 // pred_fallthru
      _
    %v42 = vld [vmem:[#allocation2] sm:$0xf]
    %v43 = vld [vmem:[#allocation5] sm:$0xf]
    %v44 = vld [vmem:[#allocation5 + $0x4] sm:$0xf]
    %v45 = vld [vmem:[#allocation5 + $0x8] sm:$0xf]
    %v46 = vld [vmem:[#allocation5 + $0xc] sm:$0xf]
    %v51 = vunpack.c.l.b16 %v43
    %v52 = vunpack.c.l.b16 %v44
    %v53 = vunpack.c.l.b16 %v45
    %v54 = vunpack.c.l.b16 %v46
    %v55 = vpack.c.b16 %v52, %v51
    %v56 = vpack.c.b16 %v54, %v53
    %vm59 = vcmask 261120
    %v61 = vsel %vm59, %v42, 0
    %63 = vmatprep.subr.bf16.mxu0 0
    %64 = vmatpush1.bf16.msra.mxu0 %v55
    %65 = vmatprep.subr.bf16.mxu0 0
    %66 = vmatpush1.bf16.msra.mxu0 %v56
    %67 = vmatprep.subr.bf16.mxu0 0
    %68 = vmatpush1.bf16.msra.mxu0 0
    %69 = vmatprep.subr.bf16.mxu0 0
    %70 = vmatpush1.bf16.msra.mxu0 0
    %71 = vmatprep.subr.bf16.mxu0 0
    %72 = vmatpush1.bf16.msra.mxu0 0
    %73 = vmatprep.subr.bf16.mxu0 0
    %74 = vmatpush1.bf16.msra.mxu0 0
    %75 = vmatprep.subr.bf16.mxu0 0
    %76 = vmatpush1.bf16.msra.mxu0 0
    %77 = vmatprep.subr.bf16.mxu0 0
    %78 = vmatpush1.bf16.msra.mxu0 0
    %79 = vmatprep.subr.bf16.mxu0 0
    %80 = vmatpush1.bf16.msra.mxu0 0
    %81 = vmatprep.subr.bf16.mxu0 0
    %82 = vmatpush1.bf16.msra.mxu0 0
    %83 = vmatprep.subr.bf16.mxu0 0
    %84 = vmatpush1.bf16.msra.mxu0 0
    %85 = vmatprep.subr.bf16.mxu0 0
    %86 = vmatpush1.bf16.msra.mxu0 0
    %87 = vmatprep.subr.bf16.mxu0 0
    %88 = vmatpush1.bf16.msra.mxu0 0
    %89 = vmatprep.subr.bf16.mxu0 0
    %90 = vmatpush1.bf16.msra.mxu0 0
    %91 = vmatprep.subr.bf16.mxu0 0
    %92 = vmatpush1.bf16.msra.mxu0 0
    %93 = vmatprep.subr.bf16.mxu0 0
    %94 = vmatpush1.bf16.msra.mxu0 0
    %95 = vmatprep.mubr.bf16.mxu0 0
    %96 = vmatmul.mubr.bf16.gmra.mrb[0].mxu0 %v61
    %v97 = vpop.f32.mrb[0].mxu0
    %v98 = vadd.f32 0.0, %v97
    %v99 = vpop.f32.mrb[0].mxu0
    %v100 = vpop.f32.mrb[0].mxu0
    %v101 = vpop.f32.mrb[0].mxu0
    %102 = vdwg.mxu0
    %v103 = vld [vmem:[%s2] sm:$0x1]
    %v105 = vlaneseq
    %v106 = vshrl.u32 %v105, 7
    %v107 = vsub.s32 0, %v106
    %v108 = vrot.slane %v103, %v107
    %v110 = vmul.f32 %v98, %v108
    %111 = vst [vmem:[#allocation7] sm:$0xff] %v110
    // Predicated region
    $region22: #{tpu_custom_call.1} parent=1 // pred_check
      _
    $region23: #{tpu_custom_call.1} parent=1 // pred_check_branch
      %113 = sbr.rel (0) target = $region25
    $region24: #{tpu_custom_call.1} parent=1 // pred_region
      %s115 = ssub.s32 128, 128
      %116 = vsyncadd [#allocation4], %s115
      %s118 = sshll.u32 [#allocation7], 4
      %s119 = int_to_ptr.vmem [resolvable:$true] %s118
      %121 = dma.vmem_to_hbm [thread:$0]  %s119, 128, %s3, [#allocation4]
    $region25: #{tpu_custom_call.1} parent=1 // pred_fallthru
      _
    // Predicated region
    $region26: #{tpu_custom_call.1} parent=1 // pred_check
      _
    $region27: #{tpu_custom_call.1} parent=1 // pred_check_branch
      %123 = sbr.rel (0) target = $region29
    $region28: #{tpu_custom_call.1} parent=1 // pred_region
      %124 = dma.done [#allocation4], 128
    $region29: #{tpu_custom_call.1} parent=1 // pred_fallthru
      _
    %125 = vsyncpa [#allocation3], 1
    %126 = vsyncpa [#allocation6], 1
    %127 = vsyncpa [#allocation4], 1

</llo_original>
